<compile_context>
chip_gen: v6e
topology: v6e:2x2x1
jax: 0.10.0
libtpu: 0.0.40
codegen_flags: <defaults>
</compile_context>

<pallas_src>
import jax
import jax.numpy as jnp
from jax import lax
from jax.experimental import pallas as pl
from jax.experimental.pallas import tpu as pltpu


def _mlp_kernel(x_ref, w1_ref, b1_ref, w2_ref, b2_ref, w3_ref, b3_ref, o_ref):
    # x_ref: (TB, 30) f32 tile straight from HBM.  Cast to bf16 on the VPU
    # (free under memory-bound slack) for a single-pass MXU matmul.
    x_b = x_ref[...].astype(jnp.bfloat16)                         # (TB, 30)

    # Layer 1: h1[o, b] = sum_d w1[o, d] * x[b, d]  -> (32, TB), batch on lanes.
    # Contracting dim 1 of both operands == w1 @ x.T; Mosaic handles the
    # relayout (same pattern as q @ k.T in flash attention).
    h1 = lax.dot_general(w1_ref[...], x_b, (((1,), (1,)), ((), ())),
                         preferred_element_type=jnp.float32)      # (32, TB)
    h1 = jnp.maximum(h1 + b1_ref[...], 0.0)

    # Layer 2: Linear(32, 16) + ReLU (bf16 MXU, f32 accumulation).
    h2 = jnp.dot(w2_ref[...], h1.astype(jnp.bfloat16),
                 preferred_element_type=jnp.float32)              # (16, TB)
    h2 = jnp.maximum(h2 + b2_ref[...], 0.0)

    # Layer 3: Linear(16, 1).  N=1 matmul replaced by a VPU multiply +
    # sublane (XLU) reduction, keeping the result lane-dense as (1, TB).
    logits = jnp.sum(h2 * w3_ref[...], axis=0, keepdims=True) + b3_ref[...]

    # Exact sigmoid: exp on the EUP, one divide over a (1, TB) slab (noise).
    o_ref[...] = 1.0 / (1.0 + jnp.exp(-logits))


def breast_cancer_classifier(x, params, *, block_b=16384):
    """x: (B, 30) float32.  Returns (B, 1) float32 probabilities.

    params (PyTorch (out, in) layout):
      w1 (32, 30) bf16, b1 (32, 1) f32,
      w2 (16, 32) bf16, b2 (16, 1) f32,
      w3 (1, 16)  f32,  b3 (1, 1)  f32.
    """
    B, F = x.shape
    assert F == 30
    w1, b1 = params["w1"], params["b1"]
    w2, b2 = params["w2"], params["b2"]
    w3, b3 = params["w3"], params["b3"]

    # (1, 16) -> (16, 1) column so it lane-broadcasts against (16, TB) h2.
    w3_col = w3.reshape(16, 1).astype(jnp.float32)

    # ---- Batch tile selection -------------------------------------------
    # Multiple of 128 lanes.  The f32 (tb, 30) tile occupies ~tb*512 B in VMEM
    # (lane-padded to 128), so tb=16K => 8 MiB/buffer, 16 MiB double-buffered.
    block_b = max(128, (block_b // 128) * 128)
    tb = min(block_b, 128 * pl.cdiv(B, 128))
    # Keep >= 2 grid steps so the "parallel" axis can split across v7x's two
    # TensorCores (no effect on single-TC v5e/v6e, harmless for small B).
    tb = min(tb, max(128, 128 * pl.cdiv(B, 2 * 128)))
    tb = max(128, (tb // 128) * 128)

    grid = (pl.cdiv(B, tb),)          # ragged last block handled by Pallas

    const = lambda arr: pl.BlockSpec(arr.shape, lambda i: (0, 0))

    # Output is produced transposed, (1, B), so stores stay lane-dense.
    outT = pl.pallas_call(
        _mlp_kernel,
        out_shape=jax.ShapeDtypeStruct((1, B), jnp.float32),
        grid=grid,
        in_specs=[
            pl.BlockSpec((tb, 30), lambda i: (i, 0)),   # x tiles: pipelined DMA
            const(w1), const(b1),
            const(w2), const(b2),
            const(w3_col), const(b3),
        ],
        out_specs=pl.BlockSpec((1, tb), lambda i: (0, i)),   # lane-dense output
        compiler_params=pltpu.CompilerParams(
            dimension_semantics=("parallel",),   # megacore split on v7x
            # 16 MiB double-buffered x + small output/weights; 40 MiB is safe
            # headroom on v5e/v6e (128 MiB) and under v7x's 64 MiB ceiling.
            vmem_limit_bytes=40 * 1024 * 1024,
        ),
    )(x, w1, b1, w2, b2, w3_col, b3)

    # (1, B) -> (B, 1): transpose with a unit dim is effectively a reshape.
    return outT.T


def init_params(key):
    """PyTorch-shaped params (uniform +/- 1/sqrt(fan_in), like nn.Linear)."""
    ks = jax.random.split(key, 6)

    def linear(kw, kb, fan_in, fan_out, w_dtype):
        bound = 1.0 / jnp.sqrt(float(fan_in))
        w_pt = jax.random.uniform(kw, (fan_out, fan_in), jnp.float32, -bound, bound)
        b_pt = jax.random.uniform(kb, (fan_out,), jnp.float32, -bound, bound)
        return w_pt.astype(w_dtype), b_pt.reshape(fan_out, 1)

    w1, b1 = linear(ks[0], ks[1], 30, 32, jnp.bfloat16)
    w2, b2 = linear(ks[2], ks[3], 32, 16, jnp.bfloat16)
    w3, b3 = linear(ks[4], ks[5], 16, 1, jnp.float32)
    return {"w1": w1, "b1": b1, "w2": w2, "b2": b2, "w3": w3, "b3": b3}


def _reference(x, p):
    w1 = p["w1"].astype(jnp.float32)
    w2 = p["w2"].astype(jnp.float32)
    w3 = p["w3"].astype(jnp.float32)
    h1 = jnp.maximum(x @ w1.T + p["b1"].reshape(1, -1), 0.0)
    h2 = jnp.maximum(h1 @ w2.T + p["b2"].reshape(1, -1), 0.0)
    return jax.nn.sigmoid(h2 @ w3.T + p["b3"].reshape(1, -1))


if __name__ == "__main__":
    key = jax.random.PRNGKey(0)
    k_x, k_p = jax.random.split(key)
    # 300 is deliberately not a multiple of the 128-lane tile so both the
    # multi-step grid and the ragged last block are exercised.
    B = 300
    x = jax.random.normal(k_x, (B, 30), dtype=jnp.float32)
    params = init_params(k_p)

    out = breast_cancer_classifier(x, params)
    out = jax.block_until_ready(out)

    ref = _reference(x, params)
    assert out.shape == (B, 1)
    # bf16 weights / in-kernel bf16 cast of x => slightly loosened tolerance.
    assert jnp.allclose(out, ref, atol=2e-2, rtol=0.0), "mismatch vs reference"
    print("KERNEL_OK")
</pallas_src>

<mosaic_0001>
module attributes {stable_mosaic.version = 11 : i64} {
  func.func @_mlp_kernel(%arg0: i32, %arg1: memref<256x30xf32, #tpu.memory_space<vmem>>, %arg2: memref<32x30xbf16, #tpu.memory_space<vmem>>, %arg3: memref<32x1xf32, #tpu.memory_space<vmem>>, %arg4: memref<16x32xbf16, #tpu.memory_space<vmem>>, %arg5: memref<16x1xf32, #tpu.memory_space<vmem>>, %arg6: memref<16x1xf32, #tpu.memory_space<vmem>>, %arg7: memref<1x1xf32, #tpu.memory_space<vmem>>, %arg8: memref<1x256xf32, #tpu.memory_space<vmem>>) attributes {dimension_semantics = [#tpu.dimension_semantics<parallel>], iteration_bounds = array<i64: 2>, scalar_prefetch = 0 : i64, scratch_operands = 0 : i64, tpu.core_type = #tpu.core_type<tc>, window_params = [{transform_indices = @transform_0, window_bounds = array<i64: 256, 30>}, {pipeline_mode = #tpu.pipeline_mode<synchronous>, transform_indices = @transform_1, window_bounds = array<i64: 32, 30>}, {pipeline_mode = #tpu.pipeline_mode<synchronous>, transform_indices = @transform_2, window_bounds = array<i64: 32, 1>}, {pipeline_mode = #tpu.pipeline_mode<synchronous>, transform_indices = @transform_3, window_bounds = array<i64: 16, 32>}, {pipeline_mode = #tpu.pipeline_mode<synchronous>, transform_indices = @transform_4, window_bounds = array<i64: 16, 1>}, {pipeline_mode = #tpu.pipeline_mode<synchronous>, transform_indices = @transform_5, window_bounds = array<i64: 16, 1>}, {pipeline_mode = #tpu.pipeline_mode<synchronous>, transform_indices = @transform_6, window_bounds = array<i64: 1, 1>}, {transform_indices = @transform_7, window_bounds = array<i64: 1, 256>}]} {
    %c0 = arith.constant 0 : index
    %c0_0 = arith.constant 0 : index
    %0 = vector.load %arg1[%c0, %c0_0] : memref<256x30xf32, #tpu.memory_space<vmem>>, vector<256x30xf32>
    %1 = arith.truncf %0 : vector<256x30xf32> to vector<256x30xbf16>
    %c0_1 = arith.constant 0 : index
    %c0_2 = arith.constant 0 : index
    %2 = vector.load %arg2[%c0_1, %c0_2] : memref<32x30xbf16, #tpu.memory_space<vmem>>, vector<32x30xbf16>
    %cst = arith.constant dense<0.000000e+00> : vector<32x256xf32>
    %3 = tpu.matmul %2, %1, %cst {dimension_numbers = #tpu.dot_dimension_numbers<[1], [1], [0], [0], [0, 0, 1, 0], [], []>} : vector<32x30xbf16>, vector<256x30xbf16>, vector<32x256xf32> -> vector<32x256xf32>
    %c0_3 = arith.constant 0 : index
    %c0_4 = arith.constant 0 : index
    %4 = vector.load %arg3[%c0_3, %c0_4] : memref<32x1xf32, #tpu.memory_space<vmem>>, vector<32x1xf32>
    %5 = vector.broadcast %4 : vector<32x1xf32> to vector<32x256xf32>
    %6 = arith.addf %3, %5 : vector<32x256xf32>
    %cst_5 = arith.constant 0.000000e+00 : f32
    %7 = vector.broadcast %cst_5 : f32 to vector<32x256xf32>
    %8 = arith.maximumf %6, %7 : vector<32x256xf32>
    %c0_6 = arith.constant 0 : index
    %c0_7 = arith.constant 0 : index
    %9 = vector.load %arg4[%c0_6, %c0_7] : memref<16x32xbf16, #tpu.memory_space<vmem>>, vector<16x32xbf16>
    %10 = arith.truncf %8 : vector<32x256xf32> to vector<32x256xbf16>
    %cst_8 = arith.constant dense<0.000000e+00> : vector<16x256xf32>
    %11 = tpu.matmul %9, %10, %cst_8 {dimension_numbers = #tpu.dot_dimension_numbers<[1], [0], [0], [1], [0, 0, 1, 1], [], []>} : vector<16x32xbf16>, vector<32x256xbf16>, vector<16x256xf32> -> vector<16x256xf32>
    %c0_9 = arith.constant 0 : index
    %c0_10 = arith.constant 0 : index
    %12 = vector.load %arg5[%c0_9, %c0_10] : memref<16x1xf32, #tpu.memory_space<vmem>>, vector<16x1xf32>
    %13 = vector.broadcast %12 : vector<16x1xf32> to vector<16x256xf32>
    %14 = arith.addf %11, %13 : vector<16x256xf32>
    %cst_11 = arith.constant 0.000000e+00 : f32
    %15 = vector.broadcast %cst_11 : f32 to vector<16x256xf32>
    %16 = arith.maximumf %14, %15 : vector<16x256xf32>
    %c0_12 = arith.constant 0 : index
    %c0_13 = arith.constant 0 : index
    %17 = vector.load %arg6[%c0_12, %c0_13] : memref<16x1xf32, #tpu.memory_space<vmem>>, vector<16x1xf32>
    %18 = vector.broadcast %17 : vector<16x1xf32> to vector<16x256xf32>
    %19 = arith.mulf %16, %18 : vector<16x256xf32>
    %cst_14 = arith.constant dense<0.000000e+00> : vector<256xf32>
    %20 = vector.multi_reduction <add>, %19, %cst_14 [0] : vector<16x256xf32> to vector<256xf32>
    %21 = vector.shape_cast %20 : vector<256xf32> to vector<1x256xf32>
    %c0_15 = arith.constant 0 : index
    %c0_16 = arith.constant 0 : index
    %22 = vector.load %arg7[%c0_15, %c0_16] : memref<1x1xf32, #tpu.memory_space<vmem>>, vector<1x1xf32>
    %23 = vector.broadcast %22 : vector<1x1xf32> to vector<1x256xf32>
    %24 = arith.addf %21, %23 : vector<1x256xf32>
    %cst_17 = arith.constant 0.000000e+00 : f32
    %25 = vector.broadcast %cst_17 : f32 to vector<1x256xf32>
    %26 = arith.subf %25, %24 : vector<1x256xf32>
    %27 = math.exp %26 : vector<1x256xf32>
    %cst_18 = arith.constant 1.000000e+00 : f32
    %28 = vector.broadcast %cst_18 : f32 to vector<1x256xf32>
    %29 = arith.addf %28, %27 : vector<1x256xf32>
    %cst_19 = arith.constant 1.000000e+00 : f32
    %30 = vector.broadcast %cst_19 : f32 to vector<1x256xf32>
    %31 = arith.divf %30, %29 : vector<1x256xf32>
    %c0_20 = arith.constant 0 : index
    %c0_21 = arith.constant 0 : index
    %32 = vector.load %arg8[%c0_20, %c0_21] : memref<1x256xf32, #tpu.memory_space<vmem>>, vector<1x256xf32>
    tpu.vector_store %arg8[%c0_20, %c0_21], %31 {strides = array<i32>} : memref<1x256xf32, #tpu.memory_space<vmem>>, vector<1x256xf32>,
    return
  }
  func.func @transform_0(%arg0: i32) -> (i32, i32) {
    %c0_i32 = arith.constant 0 : i32
    %c0_i32_0 = arith.constant 0 : i32
    return %arg0, %c0_i32 : i32, i32
  }
  func.func @transform_1(%arg0: i32) -> (i32, i32) {
    %c0_i32 = arith.constant 0 : i32
    %c0_i32_0 = arith.constant 0 : i32
    %c0_i32_1 = arith.constant 0 : i32
    return %c0_i32, %c0_i32_0 : i32, i32
  }
  func.func @transform_2(%arg0: i32) -> (i32, i32) {
    %c0_i32 = arith.constant 0 : i32
    %c0_i32_0 = arith.constant 0 : i32
    %c0_i32_1 = arith.constant 0 : i32
    return %c0_i32, %c0_i32_0 : i32, i32
  }
  func.func @transform_3(%arg0: i32) -> (i32, i32) {
    %c0_i32 = arith.constant 0 : i32
    %c0_i32_0 = arith.constant 0 : i32
    %c0_i32_1 = arith.constant 0 : i32
    return %c0_i32, %c0_i32_0 : i32, i32
  }
  func.func @transform_4(%arg0: i32) -> (i32, i32) {
    %c0_i32 = arith.constant 0 : i32
    %c0_i32_0 = arith.constant 0 : i32
    %c0_i32_1 = arith.constant 0 : i32
    return %c0_i32, %c0_i32_0 : i32, i32
  }
  func.func @transform_5(%arg0: i32) -> (i32, i32) {
    %c0_i32 = arith.constant 0 : i32
    %c0_i32_0 = arith.constant 0 : i32
    %c0_i32_1 = arith.constant 0 : i32
    return %c0_i32, %c0_i32_0 : i32, i32
  }
  func.func @transform_6(%arg0: i32) -> (i32, i32) {
    %c0_i32 = arith.constant 0 : i32
    %c0_i32_0 = arith.constant 0 : i32
    %c0_i32_1 = arith.constant 0 : i32
    return %c0_i32, %c0_i32_0 : i32, i32
  }
  func.func @transform_7(%arg0: i32) -> (i32, i32) {
    %c0_i32 = arith.constant 0 : i32
    %c0_i32_0 = arith.constant 0 : i32
    return %c0_i32, %arg0 : i32, i32
  }
}

</mosaic_0001>

<llo_original>
// kernel: tpu_custom_call.1
$region0: #{tpu_custom_call.1}
  #allocation0 [shape = 'u32[]', space=smem, size = 0x4, offset = 0x4, fixed_abs, tag = 'smem constant byte address 0x4 - core index']
  #allocation1 [shape = 'u32[144,128]{1,0:T(1,128)}', space=vmem, size = 0x12000, scoped, tag = 'internal scratch']
  #allocation2 [shape = 'f32[1,1]{1,0:T(1,128)S(1)}', space=vmem, size = 0x200, scoped, tag = 'scoped memory for tpu_custom_call.1']
  %s0 = inlined_call_operand.vmem [shape: f32[300,30], index: 0, kind: input, shape index: {}]
  %s1 = inlined_call_operand.vmem [shape: bf16[32,30], index: 1, kind: input, shape index: {}]
  %s2 = inlined_call_operand.vmem [shape: f32[32,1], index: 2, kind: input, shape index: {}]
  %s3 = inlined_call_operand.vmem [shape: bf16[16,32], index: 3, kind: input, shape index: {}]
  %s4 = inlined_call_operand.vmem [shape: f32[16,1], index: 4, kind: input, shape index: {}]
  %s5 = inlined_call_operand.vmem [shape: f32[16,1], index: 5, kind: input, shape index: {}]
  %s6 = inlined_call_operand.<no memory space> [shape: f32[1,1], index: 6, kind: input, shape index: {}]
  %s7 = inlined_call_operand.hbm [shape: f32[1,300], index: 7, kind: output, shape index: {}]
  %s8 = sld [smem:[#allocation0]]
  $region61: #{tpu_custom_call.1} parent=0
    _
  %s10 = ssub.s32 1, %s8
  %s11 = scalar_select 0, %s10, %s8
  %v12 = vstv %s6
  %13 = vst [vmem:[#allocation2] sm:$0x1] %v12
  $region1: #{tpu_custom_call.1} parent=0
    #allocation3 [shape = 'u8[2048]{0}', space=vmem, size = 0x800, scoped, tag = 'output window, operand 0']
    #allocation4 [shape = 's32[2]{0}', space=sflag, size = 0x8, scoped, tag = 'scoped memory for tpu_custom_call.1']
    %14 = vsyncpa [#allocation4], 0
    %s15 = scalar_lea.sflag [#allocation4], 1
    %16 = vsyncpa %s15, 0
    loop: start=0, step=1, limit=4
    $region2: #{tpu_custom_call.1} parent=1 // loop_pre_header
      _
    $region3: #{tpu_custom_call.1} parent=1 // loop_header
      %s18 = sphi 0, %s22
      %p19 = scmp.ge.s32.totalorder %s18, 4
      %s28 = sphi 0, %s30
      %s31 = sphi 0, %s28
      %s32 = sphi 0, %s31
      %s48 = sphi 0, %s32
      %s52 = sphi 0, %s52
      %s54 = sphi 0, %s52
      %s55 = sphi 0, %s54
      %s69 = sphi 0, %s55
      %s73 = sphi 0, %s73
      %s75 = sphi 0, %s73
      %s76 = sphi 0, %s75
      %s90 = sphi 0, %s76
      %s94 = sphi 0, %s94
      %s96 = sphi 0, %s94
      %s97 = sphi 0, %s96
      %s111 = sphi 0, %s97
      %s115 = sphi 0, %s115
      %s117 = sphi 0, %s115
      %s118 = sphi 0, %s117
      %s132 = sphi 0, %s118
      %s136 = sphi 0, %s136
      %s138 = sphi 0, %s136
      %s139 = sphi 0, %s138
      %s153 = sphi 0, %s139
      %s157 = sphi 0, %s157
      %s159 = sphi 0, %s157
      %s160 = sphi 0, %s159
      %s174 = sphi 0, %s160
      %s180 = sphi 0, %s182
      %s183 = sphi 0, %s180
      %s184 = sphi 0, %s183
      %s200 = sphi 0, %s184
    $region4: #{tpu_custom_call.1} parent=1 // loop_header_branch
      %21 = sbr.rel (%p19) target = $region8
    $region5: #{tpu_custom_call.1} parent=1 // loop_body
      %s23 = ssub.s32 %s18, 1
      %s24 = ssub.s32 %s18, 2
      %s25 = sadd.s32 %s18, 1
      %s26 = ssub.s32 %s18, %s25
      %p27 = scmp.eq.s32.totalorder %s26, 0
      %s29 = sadd.s32 %s28, 1
      %s30 = scalar_select %p27, %s28, %s29
      %p33 = pneg %p27
      %p34 = scmp.eq.s32.totalorder %s18, 1
      %p35 = por %p33, %p34
      %p36 = scmp.ne.s32.totalorder %s28, %s31
      %p37 = scmp.eq.s32.totalorder %s18, 0
      %p38 = por %p36, %p37
      %p39 = scmp.ne.s32.totalorder %s28, %s31
      %p40 = scmp.eq.s32.totalorder %s23, 1
      %p41 = por %p39, %p40
      %p42 = scmp.ne.s32.totalorder %s31, %s32
      %p43 = scmp.eq.s32.totalorder %s23, 0
      %p44 = por %p42, %p43
      %p45 = scmp.ne.s32.totalorder %s31, %s32
      %p46 = scmp.eq.s32.totalorder %s24, 1
      %p47 = por %p45, %p46
      %p49 = scmp.ne.s32.totalorder %s32, %s48
      %p50 = scmp.eq.s32.totalorder %s24, 0
      %p51 = por %p49, %p50
      %s53 = sadd.s32 %s52, 1
      %p56 = scmp.eq.s32.totalorder %s18, 1
      %p57 = scmp.ne.s32.totalorder %s52, %s54
      %p58 = scmp.eq.s32.totalorder %s18, 0
      %p59 = por %p57, %p58
      %p60 = scmp.ne.s32.totalorder %s52, %s54
      %p61 = scmp.eq.s32.totalorder %s23, 1
      %p62 = por %p60, %p61
      %p63 = scmp.ne.s32.totalorder %s54, %s55
      %p64 = scmp.eq.s32.totalorder %s23, 0
      %p65 = por %p63, %p64
      %p66 = scmp.ne.s32.totalorder %s54, %s55
      %p67 = scmp.eq.s32.totalorder %s24, 1
      %p68 = por %p66, %p67
      %p70 = scmp.ne.s32.totalorder %s55, %s69
      %p71 = scmp.eq.s32.totalorder %s24, 0
      %p72 = por %p70, %p71
      %s74 = sadd.s32 %s73, 1
      %p77 = scmp.eq.s32.totalorder %s18, 1
      %p78 = scmp.ne.s32.totalorder %s73, %s75
      %p79 = scmp.eq.s32.totalorder %s18, 0
      %p80 = por %p78, %p79
      %p81 = scmp.ne.s32.totalorder %s73, %s75
      %p82 = scmp.eq.s32.totalorder %s23, 1
      %p83 = por %p81, %p82
      %p84 = scmp.ne.s32.totalorder %s75, %s76
      %p85 = scmp.eq.s32.totalorder %s23, 0
      %p86 = por %p84, %p85
      %p87 = scmp.ne.s32.totalorder %s75, %s76
      %p88 = scmp.eq.s32.totalorder %s24, 1
      %p89 = por %p87, %p88
      %p91 = scmp.ne.s32.totalorder %s76, %s90
      %p92 = scmp.eq.s32.totalorder %s24, 0
      %p93 = por %p91, %p92
      %s95 = sadd.s32 %s94, 1
      %p98 = scmp.eq.s32.totalorder %s18, 1
      %p99 = scmp.ne.s32.totalorder %s94, %s96
      %p100 = scmp.eq.s32.totalorder %s18, 0
      %p101 = por %p99, %p100
      %p102 = scmp.ne.s32.totalorder %s94, %s96
      %p103 = scmp.eq.s32.totalorder %s23, 1
      %p104 = por %p102, %p103
      %p105 = scmp.ne.s32.totalorder %s96, %s97
      %p106 = scmp.eq.s32.totalorder %s23, 0
      %p107 = por %p105, %p106
      %p108 = scmp.ne.s32.totalorder %s96, %s97
      %p109 = scmp.eq.s32.totalorder %s24, 1
      %p110 = por %p108, %p109
      %p112 = scmp.ne.s32.totalorder %s97, %s111
      %p113 = scmp.eq.s32.totalorder %s24, 0
      %p114 = por %p112, %p113
      %s116 = sadd.s32 %s115, 1
      %p119 = scmp.eq.s32.totalorder %s18, 1
      %p120 = scmp.ne.s32.totalorder %s115, %s117
      %p121 = scmp.eq.s32.totalorder %s18, 0
      %p122 = por %p120, %p121
      %p123 = scmp.ne.s32.totalorder %s115, %s117
      %p124 = scmp.eq.s32.totalorder %s23, 1
      %p125 = por %p123, %p124
      %p126 = scmp.ne.s32.totalorder %s117, %s118
      %p127 = scmp.eq.s32.totalorder %s23, 0
      %p128 = por %p126, %p127
      %p129 = scmp.ne.s32.totalorder %s117, %s118
      %p130 = scmp.eq.s32.totalorder %s24, 1
      %p131 = por %p129, %p130
      %p133 = scmp.ne.s32.totalorder %s118, %s132
      %p134 = scmp.eq.s32.totalorder %s24, 0
      %p135 = por %p133, %p134
      %s137 = sadd.s32 %s136, 1
      %p140 = scmp.eq.s32.totalorder %s18, 1
      %p141 = scmp.ne.s32.totalorder %s136, %s138
      %p142 = scmp.eq.s32.totalorder %s18, 0
      %p143 = por %p141, %p142
      %p144 = scmp.ne.s32.totalorder %s136, %s138
      %p145 = scmp.eq.s32.totalorder %s23, 1
      %p146 = por %p144, %p145
      %p147 = scmp.ne.s32.totalorder %s138, %s139
      %p148 = scmp.eq.s32.totalorder %s23, 0
      %p149 = por %p147, %p148
      %p150 = scmp.ne.s32.totalorder %s138, %s139
      %p151 = scmp.eq.s32.totalorder %s24, 1
      %p152 = por %p150, %p151
      %p154 = scmp.ne.s32.totalorder %s139, %s153
      %p155 = scmp.eq.s32.totalorder %s24, 0
      %p156 = por %p154, %p155
      %s158 = sadd.s32 %s157, 1
      %p161 = scmp.eq.s32.totalorder %s18, 1
      %p162 = scmp.ne.s32.totalorder %s157, %s159
      %p163 = scmp.eq.s32.totalorder %s18, 0
      %p164 = por %p162, %p163
      %p165 = scmp.ne.s32.totalorder %s157, %s159
      %p166 = scmp.eq.s32.totalorder %s23, 1
      %p167 = por %p165, %p166
      %p168 = scmp.ne.s32.totalorder %s159, %s160
      %p169 = scmp.eq.s32.totalorder %s23, 0
      %p170 = por %p168, %p169
      %p171 = scmp.ne.s32.totalorder %s159, %s160
      %p172 = scmp.eq.s32.totalorder %s24, 1
      %p173 = por %p171, %p172
      %p175 = scmp.ne.s32.totalorder %s160, %s174
      %p176 = scmp.eq.s32.totalorder %s24, 0
      %p177 = por %p175, %p176
      %s178 = ssub.s32 %s18, %s25
      %p179 = scmp.eq.s32.totalorder %s178, 0
      %s181 = sadd.s32 %s180, 1
      %s182 = scalar_select %p179, %s180, %s181
      %p185 = pneg %p179
      %p186 = scmp.eq.s32.totalorder %s18, 1
      %p187 = por %p185, %p186
      %p188 = scmp.ne.s32.totalorder %s180, %s183
      %p189 = scmp.eq.s32.totalorder %s18, 0
      %p190 = por %p188, %p189
      %p191 = scmp.ne.s32.totalorder %s180, %s183
      %p192 = scmp.eq.s32.totalorder %s23, 1
      %p193 = por %p191, %p192
      %p194 = scmp.ne.s32.totalorder %s183, %s184
      %p195 = scmp.eq.s32.totalorder %s23, 0
      %p196 = por %p194, %p195
      %p197 = scmp.ne.s32.totalorder %s183, %s184
      %p198 = scmp.eq.s32.totalorder %s24, 1
      %p199 = por %p197, %p198
      %p201 = scmp.ne.s32.totalorder %s184, %s200
      %p202 = scmp.eq.s32.totalorder %s24, 0
      %p203 = por %p201, %p202
      %p204 = scmp.le.s32.totalorder 1, %s18
      %p205 = scmp.lt.s32.totalorder %s18, 3
      %p206 = pnand %p204, %p205
      %p207 = pneg %p206
      // Predicated region
      $region9: #{tpu_custom_call.1} parent=5 // pred_check
        _
      $region10: #{tpu_custom_call.1} parent=5 // pred_check_branch
        %209 = sbr.rel (%p206) target = $region12
      $region11: #{tpu_custom_call.1} parent=5 // pred_region
        %s210 = ssub.s32 %s18, 1
        // Predicated region
        $region13: #{tpu_custom_call.1} parent=11 // pred_check
          %p211 = pneg %p65
        $region14: #{tpu_custom_call.1} parent=11 // pred_check_branch
          %213 = sbr.rel (%p211) target = $region16
        $region15: #{tpu_custom_call.1} parent=11 // pred_region
          _
        $region16: #{tpu_custom_call.1} parent=11 // pred_fallthru
          _
        // Predicated region
        $region17: #{tpu_custom_call.1} parent=11 // pred_check
          %p214 = pneg %p86
        $region18: #{tpu_custom_call.1} parent=11 // pred_check_branch
          %216 = sbr.rel (%p214) target = $region20
        $region19: #{tpu_custom_call.1} parent=11 // pred_region
          _
        $region20: #{tpu_custom_call.1} parent=11 // pred_fallthru
          _
        // Predicated region
        $region21: #{tpu_custom_call.1} parent=11 // pred_check
          %p217 = pneg %p107
        $region22: #{tpu_custom_call.1} parent=11 // pred_check_branch
          %219 = sbr.rel (%p217) target = $region24
        $region23: #{tpu_custom_call.1} parent=11 // pred_region
          _
        $region24: #{tpu_custom_call.1} parent=11 // pred_fallthru
          _
        // Predicated region
        $region25: #{tpu_custom_call.1} parent=11 // pred_check
          %p220 = pneg %p128
        $region26: #{tpu_custom_call.1} parent=11 // pred_check_branch
          %222 = sbr.rel (%p220) target = $region28
        $region27: #{tpu_custom_call.1} parent=11 // pred_region
          _
        $region28: #{tpu_custom_call.1} parent=11 // pred_fallthru
          _
        // Predicated region
        $region29: #{tpu_custom_call.1} parent=11 // pred_check
          %p223 = pneg %p149
        $region30: #{tpu_custom_call.1} parent=11 // pred_check_branch
          %225 = sbr.rel (%p223) target = $region32
        $region31: #{tpu_custom_call.1} parent=11 // pred_region
          _
        $region32: #{tpu_custom_call.1} parent=11 // pred_fallthru
          _
        // Predicated region
        $region33: #{tpu_custom_call.1} parent=11 // pred_check
          %p226 = pneg %p170
        $region34: #{tpu_custom_call.1} parent=11 // pred_check_branch
          %228 = sbr.rel (%p226) target = $region36
        $region35: #{tpu_custom_call.1} parent=11 // pred_region
          _
        $region36: #{tpu_custom_call.1} parent=11 // pred_fallthru
          _
      $region12: #{tpu_custom_call.1} parent=5 // pred_fallthru
        _
      %p229 = scmp.lt.s32.totalorder %s18, 2
      // Predicated region
      $region37: #{tpu_custom_call.1} parent=5 // pred_check
        %p230 = pneg %p229
      $region38: #{tpu_custom_call.1} parent=5 // pred_check_branch
        %232 = sbr.rel (%p230) target = $region40
      $region39: #{tpu_custom_call.1} parent=5 // pred_region
        // Predicated region
        $region41: #{tpu_custom_call.1} parent=39 // pred_check
          %p233 = pneg %p38
        $region42: #{tpu_custom_call.1} parent=39 // pred_check_branch
          %235 = sbr.rel (%p233) target = $region44
        $region43: #{tpu_custom_call.1} parent=39 // pred_region
          %s236 = smul.u32 32, %s18
          %s237 = ssub.s32 38, %s236
          %p238 = scmp.lt.s32.totalorder %s237, 32
          %s239 = scalar_select %p238, %s237, 32
          %s240 = smul.u32 128, %s239
          %p241 = scmp.lt.s32.totalorder %s236, 37
          %s242 = scalar_select %p241, %s236, 37
          %s243 = smul.addr %s242, 8
          %s244 = scalar_lea.vmem %s0, %s243
          %s245 = smul.u32 32, %s18
          %s246 = ssub.s32 38, %s245
          %p247 = scmp.lt.s32.totalorder %s246, 32
          %s248 = scalar_select %p247, %s246, 32
          %s249 = smul.u32 128, %s248
        $region44: #{tpu_custom_call.1} parent=39 // pred_fallthru
          _
      $region40: #{tpu_custom_call.1} parent=5 // pred_fallthru
        _
      %p250 = scmp.le.s32.totalorder 1, %s18
      %p251 = scmp.lt.s32.totalorder %s18, 3
      %p252 = pnand %p250, %p251
      %p253 = pneg %p252
      // Predicated region
      $region45: #{tpu_custom_call.1} parent=5 // pred_check
        _
      $region46: #{tpu_custom_call.1} parent=5 // pred_check_branch
        %255 = sbr.rel (%p252) target = $region48
      $region47: #{tpu_custom_call.1} parent=5 // pred_region
        %s256 = ssub.s32 %s18, 1
        %s257 = smul.u32 32, %s23
        %s258 = ssub.s32 38, %s257
        %p259 = scmp.lt.s32.totalorder %s258, 32
        %s260 = scalar_select %p259, %s258, 32
        %s261 = smul.u32 128, %s260
        %p262 = scmp.lt.s32.totalorder %s257, 37
        %s263 = scalar_select %p262, %s257, 37
        %s264 = smul.addr %s263, 8
        %s265 = scalar_lea.vmem %s0, %s264
        %p266 = pneg %p44
        %p267 = pneg %p41
        %p268 = pneg %p65
        %p269 = pneg %p62
        %p270 = pneg %p86
        %p271 = pneg %p83
        %p272 = pneg %p107
        %p273 = pneg %p104
        %p274 = pneg %p128
        %p275 = pneg %p125
        %p276 = pneg %p149
        %p277 = pneg %p146
        %p278 = pneg %p170
        %p279 = pneg %p167
        %p280 = pneg %p196
        %p281 = pneg %p193
        %s282 = sand.u32 %s183, 1
        %s283 = scalar_lea.sflag [#allocation4], %s282
        %s284 = sand.u32 %s183, 1
        %s285 = smul.addr %s284, 2
        %s286 = scalar_lea.vmem [#allocation3], %s285
        %s287 = smul.u32 32, %s23
        %s288 = ssub.s32 38, %s287
        %p289 = scmp.lt.s32.totalorder %s288, 32
        %s290 = scalar_select %p289, %s288, 32
        %s291 = smul.u32 128, %s290
        %p292 = scmp.lt.s32.totalorder %s287, 37
        %s293 = scalar_select %p292, %s287, 37
        %s294 = smul.addr %s293, 8
        %s295 = scalar_lea.vmem %s0, %s294
        %s296 = smul.u32 32, %s23
        %s297 = ssub.s32 38, %s296
        %p298 = scmp.lt.s32.totalorder %s297, 32
        %s299 = scalar_select %p298, %s297, 32
        %s300 = smul.u32 128, %s299
        %s301 = smul.u32 2, %s23
        %s302 = ssub.s32 3, %s301
        %p303 = scmp.lt.s32.totalorder %s302, 2
        %s304 = scalar_select %p303, %s302, 2
        %s305 = smul.u32 16, %s304
        %v307 = vld [vmem:[%s295] sm:$0xff]
        %v308 = vld [vmem:[%s295 + $0x8] sm:$0xff]
        %v309 = vld [vmem:[%s295 + $0x10] sm:$0xff]
        %v310 = vld [vmem:[%s295 + $0x18] sm:$0xff]
        %v311 = vld [vmem:[%s295 + $0x20] sm:$0xff]
        %v312 = vld [vmem:[%s295 + $0x28] sm:$0xff]
        %v313 = vld [vmem:[%s295 + $0x30] sm:$0xff]
        %v314 = vld [vmem:[%s295 + $0x38] sm:$0xff]
        %v315 = vld [vmem:[%s295 + $0x40] sm:$0xff]
        %v316 = vld [vmem:[%s295 + $0x48] sm:$0xff]
        %v317 = vld [vmem:[%s295 + $0x50] sm:$0xff]
        %v318 = vld [vmem:[%s295 + $0x58] sm:$0xff]
        %v319 = vld [vmem:[%s295 + $0x60] sm:$0xff]
        %v320 = vld [vmem:[%s295 + $0x68] sm:$0xff]
        %v321 = vld [vmem:[%s295 + $0x70] sm:$0xff]
        %v322 = vld [vmem:[%s295 + $0x78] sm:$0xff]
        %v323 = vld [vmem:[%s295 + $0x80] sm:$0xff]
        %v324 = vld [vmem:[%s295 + $0x88] sm:$0xff]
        %v325 = vld [vmem:[%s295 + $0x90] sm:$0xff]
        %v326 = vld [vmem:[%s295 + $0x98] sm:$0xff]
        %v327 = vld [vmem:[%s295 + $0xa0] sm:$0xff]
        %v328 = vld [vmem:[%s295 + $0xa8] sm:$0xff]
        %v329 = vld [vmem:[%s295 + $0xb0] sm:$0xff]
        %v330 = vld [vmem:[%s295 + $0xb8] sm:$0xff]
        %v331 = vld [vmem:[%s295 + $0xc0] sm:$0xff]
        %v332 = vld [vmem:[%s295 + $0xc8] sm:$0xff]
        %v333 = vld [vmem:[%s295 + $0xd0] sm:$0xff]
        %v334 = vld [vmem:[%s295 + $0xd8] sm:$0xff]
        %v335 = vld [vmem:[%s295 + $0xe0] sm:$0xff]
        %v336 = vld [vmem:[%s295 + $0xe8] sm:$0xff]
        %v337 = vld [vmem:[%s295 + $0xf0] sm:$0xff]
        %v338 = vld [vmem:[%s295 + $0xf8] sm:$0xff]
        %v339 = vpack.c.bf16 %v308, %v307
        %v340 = vpack.c.bf16 %v310, %v309
        %v341 = vpack.c.bf16 %v312, %v311
        %v342 = vpack.c.bf16 %v314, %v313
        %v343 = vpack.c.bf16 %v316, %v315
        %v344 = vpack.c.bf16 %v318, %v317
        %v345 = vpack.c.bf16 %v320, %v319
        %v346 = vpack.c.bf16 %v322, %v321
        %v347 = vpack.c.bf16 %v324, %v323
        %v348 = vpack.c.bf16 %v326, %v325
        %v349 = vpack.c.bf16 %v328, %v327
        %v350 = vpack.c.bf16 %v330, %v329
        %v351 = vpack.c.bf16 %v332, %v331
        %v352 = vpack.c.bf16 %v334, %v333
        %v353 = vpack.c.bf16 %v336, %v335
        %v354 = vpack.c.bf16 %v338, %v337
        %v355 = vld [vmem:[%s1] sm:$0xf]
        %v356 = vld [vmem:[%s1 + $0x4] sm:$0xf]
        %v357 = vld [vmem:[%s1 + $0x8] sm:$0xf]
        %v358 = vld [vmem:[%s1 + $0xc] sm:$0xf]
        %v359 = vld [vmem:[%s2] sm:$0xff]
        %v360 = vld [vmem:[%s2 + $0x8] sm:$0xff]
        %v361 = vld [vmem:[%s2 + $0x10] sm:$0xff]
        %v362 = vld [vmem:[%s2 + $0x18] sm:$0xff]
        %364 = vset.pattern.permute.xlu0 0
        %365 = vperm.xlu0 %364, %v359
        %v366 = vpop.permute.xlu0 %365
        %369 = vset.pattern.permute.xlu0 0
        %370 = vperm.xlu0 %369, %v360
        %v371 = vpop.permute.xlu0 %370
        %374 = vset.pattern.permute.xlu0 0
        %375 = vperm.xlu0 %374, %v361
        %v376 = vpop.permute.xlu0 %375
        %379 = vset.pattern.permute.xlu0 0
        %380 = vperm.xlu0 %379, %v362
        %v381 = vpop.permute.xlu0 %380
        %v387 = vunpack.c.l.b16 %v355
        %v388 = vunpack.c.l.b16 %v356
        %v389 = vunpack.c.l.b16 %v357
        %v390 = vunpack.c.l.b16 %v358
        %v391 = vpack.c.b16 %v388, %v387
        %v392 = vpack.c.b16 %v390, %v389
        %vm393 = vcmask 244736
        %v395 = vsel %vm393, %v391, 0
        %v398 = vsel %vm393, %v392, 0
        %v401 = vsel %vm393, %v339, 0
        %v404 = vsel %vm393, %v340, 0
        %v407 = vsel %vm393, %v341, 0
        %v410 = vsel %vm393, %v342, 0
        %v413 = vsel %vm393, %v343, 0
        %v416 = vsel %vm393, %v344, 0
        %v419 = vsel %vm393, %v345, 0
        %v422 = vsel %vm393, %v346, 0
        %v425 = vsel %vm393, %v347, 0
        %v428 = vsel %vm393, %v348, 0
        %v431 = vsel %vm393, %v349, 0
        %v434 = vsel %vm393, %v350, 0
        %v437 = vsel %vm393, %v351, 0
        %v440 = vsel %vm393, %v352, 0
        %v443 = vsel %vm393, %v353, 0
        %v446 = vsel %vm393, %v354, 0
        %448 = vmatprep.subr.bf16.mxu0 0
        %449 = vmatpush1.bf16.xpose.msra.mxu0 %v422
        %450 = vmatprep.subr.bf16.mxu0 0
        %451 = vmatpush1.bf16.xpose.msra.mxu0 %v419
        %452 = vmatprep.subr.bf16.mxu0 0
        %453 = vmatpush1.bf16.xpose.msra.mxu0 %v416
        %454 = vmatprep.subr.bf16.mxu0 0
        %455 = vmatpush1.bf16.xpose.msra.mxu0 %v413
        %456 = vmatprep.subr.bf16.mxu0 0
        %457 = vmatpush1.bf16.xpose.msra.mxu0 %v410
        %458 = vmatprep.subr.bf16.mxu0 0
        %459 = vmatpush1.bf16.xpose.msra.mxu0 %v407
        %460 = vmatprep.subr.bf16.mxu0 0
        %461 = vmatpush1.bf16.xpose.msra.mxu0 %v404
        %462 = vmatprep.subr.bf16.mxu0 0
        %463 = vmatpush1.bf16.xpose.msra.mxu0 %v401
        %464 = vmatprep.subr.bf16.mxu0 0
        %465 = vmatpush2.bf16.xpose.msra.mxu0 %v446
        %466 = vmatprep.subr.bf16.mxu0 0
        %467 = vmatpush2.bf16.xpose.msra.mxu0 %v443
        %468 = vmatprep.subr.bf16.mxu0 0
        %469 = vmatpush2.bf16.xpose.msra.mxu0 %v440
        %470 = vmatprep.subr.bf16.mxu0 0
        %471 = vmatpush2.bf16.xpose.msra.mxu0 %v437
        %472 = vmatprep.subr.bf16.mxu0 0
        %473 = vmatpush2.bf16.xpose.msra.mxu0 %v434
        %474 = vmatprep.subr.bf16.mxu0 0
        %475 = vmatpush2.bf16.xpose.msra.mxu0 %v431
        %476 = vmatprep.subr.bf16.mxu0 0
        %477 = vmatpush2.bf16.xpose.msra.mxu0 %v428
        %478 = vmatprep.subr.bf16.mxu0 0
        %479 = vmatpush2.bf16.xpose.msra.mxu0 %v425
        %480 = vmatprep.mubr.bf16.mxu0 0
        %481 = vmatmul.mubr.bf16.gmra.mxu0 %v395
        %v482 = vpop.f32.mrf.mxu0
        %v483 = vadd.f32 %v366, %v482
        %v484 = vpop.f32.mrf.mxu0
        %v485 = vadd.f32 %v366, %v484
        %v486 = vpop.f32.mrf.mxu0
        %v487 = vadd.f32 %v371, %v486
        %v488 = vpop.f32.mrf.mxu0
        %v489 = vadd.f32 %v371, %v488
        %490 = vmatprep.mubr.bf16.mxu0 0
        %491 = vmatmul.mubr.bf16.gmra.mxu0 %v398
        %v492 = vpop.f32.mrf.mxu0
        %v493 = vadd.f32 %v376, %v492
        %v494 = vpop.f32.mrf.mxu0
        %v495 = vadd.f32 %v376, %v494
        %v496 = vpop.f32.mrf.mxu0
        %v497 = vadd.f32 %v381, %v496
        %v498 = vpop.f32.mrf.mxu0
        %v499 = vadd.f32 %v381, %v498
        %500 = vdwg.mxu0
        %v501 = vmax.f32 %v483, 0.0
        %v502 = vmax.f32 %v485, 0.0
        %v503 = vmax.f32 %v487, 0.0
        %v504 = vmax.f32 %v489, 0.0
        %v505 = vmax.f32 %v493, 0.0
        %v506 = vmax.f32 %v495, 0.0
        %v507 = vmax.f32 %v497, 0.0
        %v508 = vmax.f32 %v499, 0.0
        %v509 = vld [vmem:[%s3] sm:$0xf]
        %v510 = vld [vmem:[%s3 + $0x4] sm:$0xf]
        %v511 = vpack.c.bf16 %v503, %v501
        %v512 = vpack.c.bf16 %v504, %v502
        %v513 = vpack.c.bf16 %v507, %v505
        %v514 = vpack.c.bf16 %v508, %v506
        %v515 = vld [vmem:[%s4] sm:$0xff]
        %v516 = vld [vmem:[%s4 + $0x8] sm:$0xff]
        %518 = vset.pattern.permute.xlu0 0
        %519 = vperm.xlu0 %518, %v515
        %v520 = vpop.permute.xlu0 %519
        %523 = vset.pattern.permute.xlu0 0
        %524 = vperm.xlu0 %523, %v516
        %v525 = vpop.permute.xlu0 %524
        %v529 = vunpack.c.l.b16 %v509
        %v530 = vunpack.c.l.b16 %v510
        %v531 = vpack.c.b16 %v530, %v529
        %vm532 = vcmask 261120
        %v534 = vsel %vm532, %v531, 0
        %536 = vmatprep.subr.bf16.mxu0 0
        %537 = vmatpush1.bf16.msra.mxu0 0
        %538 = vmatprep.subr.bf16.mxu0 0
        %539 = vmatpush1.bf16.msra.mxu0 0
        %540 = vmatprep.subr.bf16.mxu0 0
        %541 = vmatpush1.bf16.msra.mxu0 0
        %542 = vmatprep.subr.bf16.mxu0 0
        %543 = vmatpush1.bf16.msra.mxu0 0
        %544 = vmatprep.subr.bf16.mxu0 0
        %545 = vmatpush1.bf16.msra.mxu0 0
        %546 = vmatprep.subr.bf16.mxu0 0
        %547 = vmatpush1.bf16.msra.mxu0 0
        %548 = vmatprep.subr.bf16.mxu0 %v514
        %549 = vmatpush1.bf16.msra.mxu0 %v513
        %550 = vmatprep.subr.bf16.mxu0 %v512
        %551 = vmatpush1.bf16.msra.mxu0 %v511
        %552 = vmatprep.subr.bf16.mxu0 0
        %553 = vmatpush2.bf16.msra.mxu0 0
        %554 = vmatprep.subr.bf16.mxu0 0
        %555 = vmatpush2.bf16.msra.mxu0 0
        %556 = vmatprep.subr.bf16.mxu0 0
        %557 = vmatpush2.bf16.msra.mxu0 0
        %558 = vmatprep.subr.bf16.mxu0 0
        %559 = vmatpush2.bf16.msra.mxu0 0
        %560 = vmatprep.subr.bf16.mxu0 0
        %561 = vmatpush2.bf16.msra.mxu0 0
        %562 = vmatprep.subr.bf16.mxu0 0
        %563 = vmatpush2.bf16.msra.mxu0 0
        %564 = vmatprep.subr.bf16.mxu0 0
        %565 = vmatpush2.bf16.msra.mxu0 0
        %566 = vmatprep.subr.bf16.mxu0 0
        %567 = vmatpush2.bf16.msra.mxu0 0
        %568 = vmatprep.mubr.bf16.mxu0 0
        %569 = vmatmul.mubr.bf16.gmra.mxu0 %v534
        %v570 = vpop.f32.mrf.mxu0
        %v571 = vadd.f32 %v520, %v570
        %v572 = vpop.f32.mrf.mxu0
        %v573 = vadd.f32 %v520, %v572
        %v574 = vpop.f32.mrf.mxu0
        %v575 = vadd.f32 %v525, %v574
        %v576 = vpop.f32.mrf.mxu0
        %v577 = vadd.f32 %v525, %v576
        %578 = vdwg.mxu0
        %v579 = vmax.f32 %v571, 0.0
        %v580 = vmax.f32 %v573, 0.0
        %v581 = vmax.f32 %v575, 0.0
        %v582 = vmax.f32 %v577, 0.0
        %v583 = vld [vmem:[%s5] sm:$0xff]
        %v584 = vld [vmem:[%s5 + $0x8] sm:$0xff]
        %586 = vset.pattern.permute.xlu0 0
        %587 = vperm.xlu0 %586, %v583
        %v588 = vpop.permute.xlu0 %587
        %591 = vset.pattern.permute.xlu0 0
        %592 = vperm.xlu0 %591, %v584
        %v593 = vpop.permute.xlu0 %592
        %v595 = vmul.f32 %v579, %v588
        %v596 = vmul.f32 %v580, %v588
        %v597 = vmul.f32 %v581, %v593
        %v598 = vmul.f32 %v582, %v593
        %v599 = vadd.f32 %v595, %v597
        %v600 = vrot.slane %v599, 4
        %v601 = vadd.f32 %v599, %v600
        %v602 = vrot.slane %v601, 2
        %v603 = vadd.f32 %v601, %v602
        %v604 = vrot.slane %v603, 1
        %v605 = vadd.f32 %v603, %v604
        %v606 = vadd.f32 %v596, %v598
        %v607 = vrot.slane %v606, 4
        %v608 = vadd.f32 %v606, %v607
        %v609 = vrot.slane %v608, 2
        %v610 = vadd.f32 %v608, %v609
        %v611 = vrot.slane %v610, 1
        %v612 = vadd.f32 %v610, %v611
        %v613 = vld [vmem:[#allocation2] sm:$0x1]
        %615 = vset.pattern.permute.xlu0 0
        %616 = vperm.xlu0 %615, %v613
        %v617 = vpop.permute.xlu0 %616
        %v619 = vlaneseq
        %v620 = vshrl.u32 %v619, 7
        %v621 = vsub.s32 0, %v620
        %v622 = vrot.slane %v617, %v621
        %v623 = vadd.f32 %v605, %v622
        %v624 = vadd.f32 %v612, %v622
        %v625 = vsub.f32 0.0, %v623
        %v626 = vsub.f32 0.0, %v624
        %v627 = vmul.f32 %v625, 1.442695
        %v628 = vpow.pop %v627
        %v629 = vmul.f32 %v626, 1.442695
        %v630 = vpow.pop %v629
        %v631 = vadd.f32 %v628, 1.0
        %v632 = vadd.f32 %v630, 1.0
        %v633 = vrcp.pop %v631
        %v634 = vmul.f32 1.0, %v633
        %v635 = vrcp.pop %v632
        %v636 = vmul.f32 1.0, %v635
        %v639 = vcombine.low %v634, %v636
        %v641 = vunpack.c.l.s4 1966171168
        %v642 = vunpack.c.0.s8 %v641
        %v643 = vlaneseq
        %v644 = vshrl.u32 %v643, 7
        %v645 = vsub.s32 %v642, %v644
        %v646 = vrot.slane %v639, %v645
        %v648 = vunpack.c.l.s4 1966171168
        %v649 = vunpack.c.0.s8 %v648
        %v650 = vlaneseq
        %v651 = vshrl.u32 %v650, 7
        %v652 = vsub.s32 %v649, %v651
        %v653 = vrot.slane %v646, %v652
        %v655 = vlaneseq
        %vm656 = vcmp.ge.s32.totalorder %v655, 0
        %vm657 = vcmp.lt.s32.totalorder %v655, 256
        %vm658 = vmand %vm656, %vm657
        %659 = vst.msk [vmem:[%s286] sm:$0x3] %vm658, %v653
        %s660 = sand.u32 %s183, 1
        %s661 = scalar_lea.sflag [#allocation4], %s660
        %s662 = sand.u32 %s183, 1
        %s663 = smul.addr %s662, 2
        %s664 = scalar_lea.vmem [#allocation3], %s663
        // Predicated region
        $region49: #{tpu_custom_call.1} parent=47 // pred_check
          %p665 = pneg %p193
        $region50: #{tpu_custom_call.1} parent=47 // pred_check_branch
          %667 = sbr.rel (%p665) target = $region52
        $region51: #{tpu_custom_call.1} parent=47 // pred_region
          %s668 = smul.u32 2, %s23
          %s669 = ssub.s32 3, %s668
          %p670 = scmp.lt.s32.totalorder %s669, 2
          %s671 = scalar_select %p670, %s669, 2
          %s672 = smul.u32 16, %s671
          %s674 = ssub.s32 32, %s672
          %675 = vsyncadd %s661, %s674
          %p676 = scmp.ne.s32.totalorder 0, %s672
          %s677 = smul.addr %s668, 16
          %s678 = scalar_lea.hbm %s7, %s677
          %s679 = sshll.u32 %s671, 4
          %s680 = sshll.u32 %s664, 4
          %s681 = int_to_ptr.vmem [resolvable:$true] %s680
          %683 = dma.vmem_to_hbm [thread:$0]  (%p676), %s681, %s679, %s678, %s661
        $region52: #{tpu_custom_call.1} parent=47 // pred_fallthru
          _
      $region48: #{tpu_custom_call.1} parent=5 // pred_fallthru
        _
      %p684 = scmp.le.s32.totalorder 2, %s18
      // Predicated region
      $region53: #{tpu_custom_call.1} parent=5 // pred_check
        %p685 = pneg %p684
      $region54: #{tpu_custom_call.1} parent=5 // pred_check_branch
        %687 = sbr.rel (%p685) target = $region56
      $region55: #{tpu_custom_call.1} parent=5 // pred_region
        %s688 = ssub.s32 %s18, 2
        // Predicated region
        $region57: #{tpu_custom_call.1} parent=55 // pred_check
          %p689 = pneg %p199
        $region58: #{tpu_custom_call.1} parent=55 // pred_check_branch
          %691 = sbr.rel (%p689) target = $region60
        $region59: #{tpu_custom_call.1} parent=55 // pred_region
          %s692 = sand.u32 %s184, 1
          %s693 = scalar_lea.sflag [#allocation4], %s692
          %s694 = sand.u32 %s184, 1
          %s695 = smul.addr %s694, 2
          %s696 = scalar_lea.vmem [#allocation3], %s695
          %697 = dma.done %s693, 32
        $region60: #{tpu_custom_call.1} parent=55 // pred_fallthru
          _
      $region56: #{tpu_custom_call.1} parent=5 // pred_fallthru
        _
    $region6: #{tpu_custom_call.1} parent=1 // loop_footer
      %s22 = sadd.s32 1, %s18
    $region7: #{tpu_custom_call.1} parent=1 // loop_footer_branch
      %17 = sbr.rel target = $region3
    $region8: #{tpu_custom_call.1} parent=1 // loop_exit
      _
    %698 = vsyncpa [#allocation4], 1
    %s699 = scalar_lea.sflag [#allocation4], 1
    %700 = vsyncpa %s699, 1

</llo_original>
